<compile_context>
chip_gen: v7x
topology: tpu7x:2x2x1
jax: 0.10.0
libtpu: 0.0.40
codegen_flags: <defaults>
</compile_context>

<pallas_src>
import jax
import jax.numpy as jnp
from jax import lax
from jax.experimental import pallas as pl
from jax.experimental.pallas import tpu as pltpu


def _linear_kernel(x_ref, w_ref, o_ref):
    # x_ref: (BM, K) VMEM, w_ref: (N, K) VMEM, o_ref: (BM, N) VMEM
    # out[m, n] = sum_k x[m, k] * w[n, k]   (== x @ w.T, NT matmul on the MXU)
    o_ref[...] = lax.dot_general(
        x_ref[...],
        w_ref[...],
        dimension_numbers=(((1,), (1,)), ((), ())),
        preferred_element_type=jnp.float32,
    ).astype(o_ref.dtype)
    # TODO(synk): if the surrounding model adds bias/activation/residual,
    # fuse them here instead of as separate XLA ops around the pallas_call.


@jax.jit
def pallas_linear(x, w):
    """F.linear(x, w) = x @ w.T for x of shape (B, M, K), w of shape (N, K)."""
    B, M, K = x.shape
    N, K2 = w.shape
    assert K == K2, "in_features mismatch"

    BM = B * M
    x2d = x.reshape(BM, K)  # free reshape, no data movement

    out2d = pl.pallas_call(
        _linear_kernel,
        out_shape=jax.ShapeDtypeStruct((BM, N), x.dtype),
        in_specs=[
            pl.BlockSpec(memory_space=pltpu.MemorySpace.VMEM),
            pl.BlockSpec(memory_space=pltpu.MemorySpace.VMEM),
        ],
        out_specs=pl.BlockSpec(memory_space=pltpu.MemorySpace.VMEM),
        cost_estimate=pl.CostEstimate(
            flops=2 * BM * N * K,
            transcendentals=0,
            bytes_accessed=(BM * K + N * K + BM * N) * 4,
        ),
    )(x2d, w)

    return out2d.reshape(B, M, N)


if __name__ == "__main__":
    key = jax.random.PRNGKey(0)
    kx, kw = jax.random.split(key)

    # x1 as in the PyTorch module: torch.randn(1, 64, 64)
    x1 = jax.random.normal(kx, (1, 64, 64), dtype=jnp.float32)
    # __other_1__ weight: (out_features=64, in_features=64), deterministic init
    w = jax.random.normal(kw, (64, 64), dtype=jnp.float32) * 0.05

    out = pallas_linear(x1, w)
    jax.block_until_ready(out)

    # sanity check against plain JAX reference (x @ w.T); also validates that
    # Mosaic's implicit lane padding of the unpadded K=64 contraction is
    # zero-filled (no garbage lanes contributing to the sum).
    ref = jnp.einsum("bmk,nk->bmn", x1, w)
    assert out.shape == (1, 64, 64)
    assert jnp.allclose(out, ref, atol=1e-4, rtol=1e-4)

    print("KERNEL_OK")
</pallas_src>

<mosaic_0001>
module attributes {stable_mosaic.version = 11 : i64} {
  func.func @_linear_kernel(%arg0: memref<64x64xf32, #tpu.memory_space<vmem>>, %arg1: memref<64x64xf32, #tpu.memory_space<vmem>>, %arg2: memref<64x64xf32, #tpu.memory_space<vmem>>) attributes {dimension_semantics = [], scalar_prefetch = 0 : i64, scratch_operands = 0 : i64, tpu.core_type = #tpu.core_type<tc>} {
    %c0 = arith.constant 0 : index
    %c0_0 = arith.constant 0 : index
    %0 = vector.load %arg0[%c0, %c0_0] : memref<64x64xf32, #tpu.memory_space<vmem>>, vector<64x64xf32>
    %c0_1 = arith.constant 0 : index
    %c0_2 = arith.constant 0 : index
    %1 = vector.load %arg1[%c0_1, %c0_2] : memref<64x64xf32, #tpu.memory_space<vmem>>, vector<64x64xf32>
    %cst = arith.constant dense<0.000000e+00> : vector<64x64xf32>
    %2 = tpu.matmul %0, %1, %cst {dimension_numbers = #tpu.dot_dimension_numbers<[1], [1], [0], [0], [0, 0, 1, 0], [], []>} : vector<64x64xf32>, vector<64x64xf32>, vector<64x64xf32> -> vector<64x64xf32>
    %c0_3 = arith.constant 0 : index
    %c0_4 = arith.constant 0 : index
    %3 = vector.load %arg2[%c0_3, %c0_4] : memref<64x64xf32, #tpu.memory_space<vmem>>, vector<64x64xf32>
    tpu.vector_store %arg2[%c0_3, %c0_4], %2 {strides = array<i32>} : memref<64x64xf32, #tpu.memory_space<vmem>>, vector<64x64xf32>,
    return
  }
}

</mosaic_0001>

<llo_original>
// kernel: pallas_linear.1
$region0: #{pallas_linear.1}
  #allocation0 [shape = 'u32[]', space=smem, size = 0x4, offset = 0x4, fixed_abs, tag = 'smem constant byte address 0x4 - core index']
  #allocation1 [shape = 'u32[144,128]{1,0:T(1,128)}', space=vmem, size = 0x12000, scoped, tag = 'internal scratch']
  %s0 = inlined_call_operand.hbm [shape: f32[64,64], index: 0, kind: input, shape index: {}]
  %s1 = inlined_call_operand.hbm [shape: f32[64,64], index: 1, kind: input, shape index: {}]
  %s2 = inlined_call_operand.hbm [shape: f32[64,64], index: 2, kind: output, shape index: {}]
  %s3 = sld [smem:[#allocation0]]
  $region26: #{pallas_linear.1} parent=0
    _
  %s5 = ssub.s32 1, %s3
  %s6 = scalar_select 0, %s5, %s3
  $region1: #{pallas_linear.1} parent=0
    #allocation2 [shape = 'u8[32768]{0}', space=vmem, size = 0x8000, scoped, tag = 'input window, operand 0, single buffered']
    #allocation3 [shape = 's32[1]{0}', space=sflag, size = 0x4, scoped, tag = 'scoped memory for pallas_linear.1']
    #allocation4 [shape = 's32[1]{0}', space=sflag, size = 0x4, scoped, tag = 'scoped memory for pallas_linear.1']
    #allocation5 [shape = 'u8[32768]{0}', space=vmem, size = 0x8000, scoped, tag = 'input window, operand 1, single buffered']
    #allocation6 [shape = 's32[1]{0}', space=sflag, size = 0x4, scoped, tag = 'scoped memory for pallas_linear.1']
    #allocation7 [shape = 'u8[32768]{0}', space=vmem, size = 0x8000, scoped, tag = 'output window, operand 0, single buffered']
    %7 = vsyncpa [#allocation3], 0
    %8 = vsyncpa [#allocation6], 0
    %9 = vsyncpa [#allocation4], 0
    // Predicated region
    $region2: #{pallas_linear.1} parent=1 // pred_check
      _
    $region3: #{pallas_linear.1} parent=1 // pred_check_branch
      %11 = sbr.rel (0) target = $region5
    $region4: #{pallas_linear.1} parent=1 // pred_region
      %s13 = ssub.s32 1024, 1024
      %14 = vsyncadd [#allocation3], %s13
      %s15 = sshll.u32 [#allocation2], 4
      %s16 = int_to_ptr.vmem [resolvable:$true] %s15
      %21 = dma.hbm_to_vmem [thread:$0]  %s0, 1024, %s16, [#allocation3], 128, 128, 8
    $region5: #{pallas_linear.1} parent=1 // pred_fallthru
      _
    // Predicated region
    $region6: #{pallas_linear.1} parent=1 // pred_check
      _
    $region7: #{pallas_linear.1} parent=1 // pred_check_branch
      %23 = sbr.rel (0) target = $region9
    $region8: #{pallas_linear.1} parent=1 // pred_region
      %s25 = ssub.s32 1024, 1024
      %26 = vsyncadd [#allocation6], %s25
      %s27 = sshll.u32 [#allocation5], 4
      %s28 = int_to_ptr.vmem [resolvable:$true] %s27
      %33 = dma.hbm_to_vmem [thread:$0]  %s1, 1024, %s28, [#allocation6], 128, 128, 8
    $region9: #{pallas_linear.1} parent=1 // pred_fallthru
      _
    // Predicated region
    $region10: #{pallas_linear.1} parent=1 // pred_check
      _
    $region11: #{pallas_linear.1} parent=1 // pred_check_branch
      %35 = sbr.rel (0) target = $region13
    $region12: #{pallas_linear.1} parent=1 // pred_region
      %36 = dma.done [#allocation3], 1024
    $region13: #{pallas_linear.1} parent=1 // pred_fallthru
      _
    // Predicated region
    $region14: #{pallas_linear.1} parent=1 // pred_check
      _
    $region15: #{pallas_linear.1} parent=1 // pred_check_branch
      %38 = sbr.rel (0) target = $region17
    $region16: #{pallas_linear.1} parent=1 // pred_region
      %39 = dma.done [#allocation6], 1024
    $region17: #{pallas_linear.1} parent=1 // pred_fallthru
      _
    %v40 = vld [vmem:[#allocation2] sm:$0xff]
    %v41 = vld [vmem:[#allocation2 + $0x8] sm:$0xff]
    %v42 = vld [vmem:[#allocation2 + $0x10] sm:$0xff]
    %v43 = vld [vmem:[#allocation2 + $0x18] sm:$0xff]
    %v44 = vld [vmem:[#allocation2 + $0x20] sm:$0xff]
    %v45 = vld [vmem:[#allocation2 + $0x28] sm:$0xff]
    %v46 = vld [vmem:[#allocation2 + $0x30] sm:$0xff]
    %v47 = vld [vmem:[#allocation2 + $0x38] sm:$0xff]
    %v48 = vld [vmem:[#allocation5] sm:$0xff]
    %v49 = vld [vmem:[#allocation5 + $0x8] sm:$0xff]
    %v50 = vld [vmem:[#allocation5 + $0x10] sm:$0xff]
    %v51 = vld [vmem:[#allocation5 + $0x18] sm:$0xff]
    %v52 = vld [vmem:[#allocation5 + $0x20] sm:$0xff]
    %v53 = vld [vmem:[#allocation5 + $0x28] sm:$0xff]
    %v54 = vld [vmem:[#allocation5 + $0x30] sm:$0xff]
    %v55 = vld [vmem:[#allocation5 + $0x38] sm:$0xff]
    %vm56 = vcmask 523264
    %v58 = vsel %vm56, %v40, 0
    %v61 = vsel %vm56, %v41, 0
    %v64 = vsel %vm56, %v42, 0
    %v67 = vsel %vm56, %v43, 0
    %v70 = vsel %vm56, %v44, 0
    %v73 = vsel %vm56, %v45, 0
    %v76 = vsel %vm56, %v46, 0
    %v79 = vsel %vm56, %v47, 0
    %v82 = vsel %vm56, %v48, 0
    %v85 = vsel %vm56, %v49, 0
    %v88 = vsel %vm56, %v50, 0
    %v91 = vsel %vm56, %v51, 0
    %v94 = vsel %vm56, %v52, 0
    %v97 = vsel %vm56, %v53, 0
    %v100 = vsel %vm56, %v54, 0
    %v103 = vsel %vm56, %v55, 0
    %105 = vmatprep.subr.mxu0 0.0
    %106 = vmatpush1.xpose.msra.mxu0 %v82
    %107 = vmatprep.subr.mxu0 0.0
    %108 = vmatpush1.xpose.msra.mxu0 %v85
    %109 = vmatprep.subr.mxu0 0.0
    %110 = vmatpush1.xpose.msra.mxu0 %v88
    %111 = vmatprep.subr.mxu0 0.0
    %112 = vmatpush1.xpose.msra.mxu0 %v91
    %113 = vmatprep.subr.mxu0 0.0
    %114 = vmatpush1.xpose.msra.mxu0 %v94
    %115 = vmatprep.subr.mxu0 0.0
    %116 = vmatpush1.xpose.msra.mxu0 %v97
    %117 = vmatprep.subr.mxu0 0.0
    %118 = vmatpush1.xpose.msra.mxu0 %v100
    %119 = vmatprep.subr.mxu0 0.0
    %120 = vmatpush1.xpose.msra.mxu0 %v103
    %121 = vmatprep.subr.mxu0 0.0
    %122 = vmatpush1.xpose.msra.mxu0 0.0
    %123 = vmatprep.subr.mxu0 0.0
    %124 = vmatpush1.xpose.msra.mxu0 0.0
    %125 = vmatprep.subr.mxu0 0.0
    %126 = vmatpush1.xpose.msra.mxu0 0.0
    %127 = vmatprep.subr.mxu0 0.0
    %128 = vmatpush1.xpose.msra.mxu0 0.0
    %129 = vmatprep.subr.mxu0 0.0
    %130 = vmatpush1.xpose.msra.mxu0 0.0
    %131 = vmatprep.subr.mxu0 0.0
    %132 = vmatpush1.xpose.msra.mxu0 0.0
    %133 = vmatprep.subr.mxu0 0.0
    %134 = vmatpush1.xpose.msra.mxu0 0.0
    %135 = vmatprep.subr.mxu0 0.0
    %136 = vmatpush1.xpose.msra.mxu0 0.0
    %137 = vmatprep.subr.mxu0 0.0
    %138 = vmatpush1.xpose.msra.mxu0 0.0
    %139 = vmatprep.subr.mxu0 0.0
    %140 = vmatpush1.xpose.msra.mxu0 0.0
    %141 = vmatprep.subr.mxu0 0.0
    %142 = vmatpush1.xpose.msra.mxu0 0.0
    %143 = vmatprep.subr.mxu0 0.0
    %144 = vmatpush1.xpose.msra.mxu0 0.0
    %145 = vmatprep.subr.mxu0 0.0
    %146 = vmatpush1.xpose.msra.mxu0 0.0
    %147 = vmatprep.subr.mxu0 0.0
    %148 = vmatpush1.xpose.msra.mxu0 0.0
    %149 = vmatprep.subr.mxu0 0.0
    %150 = vmatpush1.xpose.msra.mxu0 0.0
    %151 = vmatprep.subr.mxu0 0.0
    %152 = vmatpush1.xpose.msra.mxu0 0.0
    %153 = vmatprep.subr.mxu0 0.0
    %154 = vmatpush1.xpose.msra.mxu0 0.0
    %155 = vmatprep.subr.mxu0 0.0
    %156 = vmatpush1.xpose.msra.mxu0 0.0
    %157 = vmatprep.subr.mxu0 0.0
    %158 = vmatpush1.xpose.msra.mxu0 0.0
    %159 = vmatprep.subr.mxu0 0.0
    %160 = vmatpush1.xpose.msra.mxu0 0.0
    %161 = vmatprep.subr.mxu0 0.0
    %162 = vmatpush1.xpose.msra.mxu0 0.0
    %163 = vmatprep.subr.mxu0 0.0
    %164 = vmatpush1.xpose.msra.mxu0 0.0
    %165 = vmatprep.subr.mxu0 0.0
    %166 = vmatpush1.xpose.msra.mxu0 0.0
    %167 = vmatprep.subr.mxu0 0.0
    %168 = vmatpush1.xpose.msra.mxu0 0.0
    %169 = vmatprep.mubr.f32.mxu0 0.0
    %170 = vmatmul.mubr.f32.gmra.mrb[0].mxu0 %v58
    %v171 = vpop.f32.mrb[0].mxu0
    %v172 = vadd.f32 0.0, %v171
    %v173 = vpop.f32.mrb[0].mxu0
    %174 = vmatprep.mubr.f32.mxu0 0.0
    %175 = vmatmul.mubr.f32.gmra.mrb[0].mxu0 %v61
    %v176 = vpop.f32.mrb[0].mxu0
    %v177 = vadd.f32 0.0, %v176
    %v178 = vpop.f32.mrb[0].mxu0
    %179 = vmatprep.mubr.f32.mxu0 0.0
    %180 = vmatmul.mubr.f32.gmra.mrb[0].mxu0 %v64
    %v181 = vpop.f32.mrb[0].mxu0
    %v182 = vadd.f32 0.0, %v181
    %v183 = vpop.f32.mrb[0].mxu0
    %184 = vmatprep.mubr.f32.mxu0 0.0
    %185 = vmatmul.mubr.f32.gmra.mrb[0].mxu0 %v67
    %v186 = vpop.f32.mrb[0].mxu0
    %v187 = vadd.f32 0.0, %v186
    %v188 = vpop.f32.mrb[0].mxu0
    %189 = vmatprep.mubr.f32.mxu0 0.0
    %190 = vmatmul.mubr.f32.gmra.mrb[0].mxu0 %v70
    %v191 = vpop.f32.mrb[0].mxu0
    %v192 = vadd.f32 0.0, %v191
    %v193 = vpop.f32.mrb[0].mxu0
    %194 = vmatprep.mubr.f32.mxu0 0.0
    %195 = vmatmul.mubr.f32.gmra.mrb[0].mxu0 %v73
    %v196 = vpop.f32.mrb[0].mxu0
    %v197 = vadd.f32 0.0, %v196
    %v198 = vpop.f32.mrb[0].mxu0
    %199 = vmatprep.mubr.f32.mxu0 0.0
    %200 = vmatmul.mubr.f32.gmra.mrb[0].mxu0 %v76
    %v201 = vpop.f32.mrb[0].mxu0
    %v202 = vadd.f32 0.0, %v201
    %v203 = vpop.f32.mrb[0].mxu0
    %204 = vmatprep.mubr.f32.mxu0 0.0
    %205 = vmatmul.mubr.f32.gmra.mrb[0].mxu0 %v79
    %v206 = vpop.f32.mrb[0].mxu0
    %v207 = vadd.f32 0.0, %v206
    %v208 = vpop.f32.mrb[0].mxu0
    %209 = vdwg.mxu0
    %210 = vst.msk [vmem:[#allocation7] sm:$0xff] %vm56, %v172
    %211 = vst.msk [vmem:[#allocation7 + $0x8] sm:$0xff] %vm56, %v177
    %212 = vst.msk [vmem:[#allocation7 + $0x10] sm:$0xff] %vm56, %v182
    %213 = vst.msk [vmem:[#allocation7 + $0x18] sm:$0xff] %vm56, %v187
    %214 = vst.msk [vmem:[#allocation7 + $0x20] sm:$0xff] %vm56, %v192
    %215 = vst.msk [vmem:[#allocation7 + $0x28] sm:$0xff] %vm56, %v197
    %216 = vst.msk [vmem:[#allocation7 + $0x30] sm:$0xff] %vm56, %v202
    %217 = vst.msk [vmem:[#allocation7 + $0x38] sm:$0xff] %vm56, %v207
    // Predicated region
    $region18: #{pallas_linear.1} parent=1 // pred_check
      _
    $region19: #{pallas_linear.1} parent=1 // pred_check_branch
      %219 = sbr.rel (0) target = $region21
    $region20: #{pallas_linear.1} parent=1 // pred_region
      %s221 = ssub.s32 1024, 1024
      %222 = vsyncadd [#allocation4], %s221
      %s223 = sshll.u32 [#allocation7], 4
      %s224 = int_to_ptr.vmem [resolvable:$true] %s223
      %229 = dma.vmem_to_hbm [thread:$0]  %s224, 1024, %s2, [#allocation4], 128, 128, 8
    $region21: #{pallas_linear.1} parent=1 // pred_fallthru
      _
    // Predicated region
    $region22: #{pallas_linear.1} parent=1 // pred_check
      _
    $region23: #{pallas_linear.1} parent=1 // pred_check_branch
      %231 = sbr.rel (0) target = $region25
    $region24: #{pallas_linear.1} parent=1 // pred_region
      %232 = dma.done [#allocation4], 1024
    $region25: #{pallas_linear.1} parent=1 // pred_fallthru
      _
    %233 = vsyncpa [#allocation3], 1
    %234 = vsyncpa [#allocation6], 1
    %235 = vsyncpa [#allocation4], 1

</llo_original>
